<compile_context>
chip_gen: v6e
topology: v6e:2x2x1
jax: 0.10.0
libtpu: 0.0.40
codegen_flags: <defaults>
</compile_context>

<pallas_src>
import functools

import jax
import jax.numpy as jnp
from jax.experimental import pallas as pl
from jax.experimental.pallas import tpu as pltpu


def _largest_divisor(n, upper, multiple_of=1):
    """Largest d <= upper with n % d == 0 and (d % multiple_of == 0 or d == n)."""
    upper = max(1, min(n, upper))
    for d in range(upper, 0, -1):
        if n % d == 0 and (d % multiple_of == 0 or d == n):
            return d
    return n


def _choose_tiles(B, T, D, itemsize):
    """Pick (batch_tile, seq_tile) so one feature buffer is <= ~4 MiB.

    4 MiB per buffer -> 8 MiB double-buffered + resident weights/accumulator:
    safely under the v5e 16 MiB scoped-VMEM default and the v7x 32-of-64 MiB
    default, while large enough to amortize the ~0.35 us per-grid-step cost.
    """
    feat_budget = 4 * 1024 * 1024
    max_rows = max(1, feat_budget // max(1, D * itemsize))  # TB*TT rows per tile
    tb = B
    if tb * 8 > max_rows:  # batch alone too big even at 8 seq rows -> tile batch too
        tb = _largest_divisor(B, max(1, max_rows // 8))
    tt_cap = max(1, max_rows // tb)
    tt = _largest_divisor(T, tt_cap, multiple_of=8)  # (8,128) sublane constraint
    return tb, tt


def _head_kernel(feat_ref, w1_ref, b1_ref, w2_ref, b2_ref, out_ref, acc_ref, *, inv_t):
    # feat_ref: (TB, TT, D)  w1: (D, H)  b1: (1, H)  w2: (H, C)  b2: (1, C)
    # out_ref: (TB, C)       acc_ref: (TB, D) f32 scratch (persists across grid)
    t = pl.program_id(1)

    @pl.when(t == 0)
    def _():
        acc_ref[...] = jnp.zeros_like(acc_ref)

    # Partial sum over this sequence tile, accumulated in f32 without
    # materializing a full f32 copy of the (possibly bf16) feature tile.
    acc_ref[...] += jnp.sum(feat_ref[...], axis=1, dtype=jnp.float32)

    @pl.when(t == pl.num_programs(1) - 1)
    def _():
        pooled = acc_ref[...] * inv_t  # mean = sum / T (scaled once, at finalize)
        # dropout is identity in eval mode.
        h = jnp.dot(pooled, w1_ref[...].astype(jnp.float32),
                    preferred_element_type=jnp.float32) + b1_ref[...].astype(jnp.float32)
        # TODO(synk): activation_fn is configurable in the module; tanh hard-coded here.
        h = jnp.tanh(h)
        y = jnp.dot(h, w2_ref[...].astype(jnp.float32),
                    preferred_element_type=jnp.float32) + b2_ref[...].astype(jnp.float32)
        out_ref[...] = y.astype(out_ref.dtype)


def roberta_classification_no_cls_head(features, w1, b1, w2, b2,
                                       *, batch_tile=None, seq_tile=None):
    """features: (B, T, D); w1: (D, H); b1: (H,); w2: (H, C); b2: (C,).

    Returns logits of shape (B, C) in float32.
    """
    B, T, D = features.shape
    H = w1.shape[1]
    C = w2.shape[1]
    b1 = b1.reshape(1, H)
    b2 = b2.reshape(1, C)

    itemsize = jnp.dtype(features.dtype).itemsize
    auto_tb, auto_tt = _choose_tiles(B, T, D, itemsize)
    tb = batch_tile if batch_tile is not None else auto_tb
    tt = seq_tile if seq_tile is not None else auto_tt
    assert B % tb == 0 and T % tt == 0, "tiles must evenly divide (B, T)"
    assert tt % 8 == 0 or tt == T, "seq tile must be a multiple of 8 or the full seq"
    assert tb % 8 == 0 or tb == B, "batch tile must be a multiple of 8 or the full batch"

    grid = (B // tb, T // tt)

    cost = pl.CostEstimate(
        flops=2 * B * T * D + 2 * B * D * H + 2 * B * H * C,
        transcendentals=B * H,
        bytes_accessed=(features.size * itemsize
                        + w1.size * jnp.dtype(w1.dtype).itemsize
                        + b1.size * jnp.dtype(b1.dtype).itemsize
                        + w2.size * jnp.dtype(w2.dtype).itemsize
                        + b2.size * jnp.dtype(b2.dtype).itemsize
                        + B * C * 4),
    )

    kernel = functools.partial(_head_kernel, inv_t=1.0 / T)

    return pl.pallas_call(
        kernel,
        out_shape=jax.ShapeDtypeStruct((B, C), jnp.float32),
        grid_spec=pltpu.PrefetchScalarGridSpec(
            num_scalar_prefetch=0,
            grid=grid,
            in_specs=[
                # Feature tiles stream over (batch, seq); weights stay resident.
                pl.BlockSpec((tb, tt, D), lambda b, t: (b, t, 0)),
                pl.BlockSpec((D, H), lambda b, t: (0, 0)),
                pl.BlockSpec((1, H), lambda b, t: (0, 0)),
                pl.BlockSpec((H, C), lambda b, t: (0, 0)),
                pl.BlockSpec((1, C), lambda b, t: (0, 0)),
            ],
            # Output block is constant along the seq axis -> accumulator-style.
            out_specs=pl.BlockSpec((tb, C), lambda b, t: (b, 0)),
            scratch_shapes=[pltpu.VMEM((tb, D), jnp.float32)],
        ),
        compiler_params=pltpu.CompilerParams(
            dimension_semantics=("parallel", "arbitrary")),
        cost_estimate=cost,
    )(features, w1, b1, w2, b2)


def _reference(features, w1, b1, w2, b2):
    pooled = jnp.mean(features.astype(jnp.float32), axis=1)
    h = jnp.tanh(pooled @ w1 + b1)
    return h @ w2 + b2


if __name__ == "__main__":
    # Small shapes consistent with the module's forward:
    #   features: (batch=2, seq=64, input_dim=32), inner_dim=32, num_classes=4
    B, T, D, H, C = 2, 64, 32, 32, 4

    key = jax.random.PRNGKey(0)
    k_feat, k_w1, k_b1, k_w2, k_b2 = jax.random.split(key, 5)

    features = jax.random.normal(k_feat, (B, T, D), dtype=jnp.float32)
    # Deterministic synthetic parameter init (module __init__ gives the shapes).
    w1 = jax.random.normal(k_w1, (D, H), dtype=jnp.float32) * 0.05
    b1 = jax.random.normal(k_b1, (H,), dtype=jnp.float32) * 0.01
    w2 = jax.random.normal(k_w2, (H, C), dtype=jnp.float32) * 0.05
    b2 = jax.random.normal(k_b2, (C,), dtype=jnp.float32) * 0.01

    ref = _reference(features, w1, b1, w2, b2)

    # 1) Auto-selected tiles (single seq tile at these toy shapes).
    out_auto = jax.block_until_ready(
        roberta_classification_no_cls_head(features, w1, b1, w2, b2))
    assert out_auto.shape == (B, C)
    assert jnp.allclose(out_auto, ref, atol=1e-5, rtol=1e-5), "auto-tile mismatch"

    # 2) Forced sequence tiling: exercises the multi-step grid-reduction
    #    accumulator path (zero @ t==0, accumulate, finalize @ last t).
    out_tiled = jax.block_until_ready(
        roberta_classification_no_cls_head(features, w1, b1, w2, b2, seq_tile=8))
    assert jnp.allclose(out_tiled, ref, atol=1e-5, rtol=1e-5), "seq-tiled mismatch"

    # 3) bf16 features stay bf16 through the DMA/pipeline; accumulation is f32.
    feat_bf16 = features.astype(jnp.bfloat16)
    ref_bf16 = _reference(feat_bf16, w1, b1, w2, b2)
    out_bf16 = jax.block_until_ready(
        roberta_classification_no_cls_head(feat_bf16, w1, b1, w2, b2, seq_tile=8))
    assert jnp.allclose(out_bf16, ref_bf16, atol=1e-2, rtol=1e-2), "bf16 mismatch"

    # TODO(synk): q_noise / spectral_norm branches only reparameterize weights at
    # init; they don't change the forward compute here, so they are omitted.
    print("KERNEL_OK")
</pallas_src>

<mosaic_0001>
module attributes {stable_mosaic.version = 11 : i64} {
  func.func @_head_kernel(%arg0: i32, %arg1: i32, %arg2: memref<2x64x32xf32, #tpu.memory_space<vmem>>, %arg3: memref<32x32xf32, #tpu.memory_space<vmem>>, %arg4: memref<1x32xf32, #tpu.memory_space<vmem>>, %arg5: memref<32x4xf32, #tpu.memory_space<vmem>>, %arg6: memref<1x4xf32, #tpu.memory_space<vmem>>, %arg7: memref<2x4xf32, #tpu.memory_space<vmem>>, %arg8: memref<2x32xf32, #tpu.memory_space<vmem>>) attributes {dimension_semantics = [#tpu.dimension_semantics<parallel>, #tpu.dimension_semantics<arbitrary>], iteration_bounds = array<i64: 1, 1>, scalar_prefetch = 0 : i64, scratch_operands = 1 : i64, tpu.core_type = #tpu.core_type<tc>, window_params = [{transform_indices = @transform_0, window_bounds = array<i64: 2, 64, 32>}, {pipeline_mode = #tpu.pipeline_mode<synchronous>, transform_indices = @transform_1, window_bounds = array<i64: 32, 32>}, {pipeline_mode = #tpu.pipeline_mode<synchronous>, transform_indices = @transform_2, window_bounds = array<i64: 1, 32>}, {pipeline_mode = #tpu.pipeline_mode<synchronous>, transform_indices = @transform_3, window_bounds = array<i64: 32, 4>}, {pipeline_mode = #tpu.pipeline_mode<synchronous>, transform_indices = @transform_4, window_bounds = array<i64: 1, 4>}, {transform_indices = @transform_5, window_bounds = array<i64: 2, 4>}]} {
    %c0_i32 = arith.constant 0 : i32
    %0 = arith.cmpi eq, %arg1, %c0_i32 : i32
    %1 = arith.extui %0 : i1 to i32
    %c0_i32_0 = arith.constant 0 : i32
    %2 = arith.cmpi ne, %1, %c0_i32_0 : i32
    scf.if %2 {
      %cst_9 = arith.constant 0.000000e+00 : f32
      %11 = vector.broadcast %cst_9 : f32 to vector<2x32xf32>
      %c0_10 = arith.constant 0 : index
      %c0_11 = arith.constant 0 : index
      %12 = vector.load %arg8[%c0_10, %c0_11] : memref<2x32xf32, #tpu.memory_space<vmem>>, vector<2x32xf32>
      tpu.vector_store %arg8[%c0_10, %c0_11], %11 {strides = array<i32>} : memref<2x32xf32, #tpu.memory_space<vmem>>, vector<2x32xf32>,
    } else {
    }
    %c0 = arith.constant 0 : index
    %c0_1 = arith.constant 0 : index
    %3 = vector.load %arg8[%c0, %c0_1] : memref<2x32xf32, #tpu.memory_space<vmem>>, vector<2x32xf32>
    %c0_2 = arith.constant 0 : index
    %c0_3 = arith.constant 0 : index
    %c0_4 = arith.constant 0 : index
    %4 = vector.load %arg2[%c0_2, %c0_3, %c0_4] : memref<2x64x32xf32, #tpu.memory_space<vmem>>, vector<2x64x32xf32>
    %cst = arith.constant dense<0.000000e+00> : vector<2x32xf32>
    %5 = vector.multi_reduction <add>, %4, %cst [1] : vector<2x64x32xf32> to vector<2x32xf32>
    %6 = arith.addf %3, %5 : vector<2x32xf32>
    %c0_5 = arith.constant 0 : index
    %c0_6 = arith.constant 0 : index
    %7 = vector.load %arg8[%c0_5, %c0_6] : memref<2x32xf32, #tpu.memory_space<vmem>>, vector<2x32xf32>
    tpu.vector_store %arg8[%c0_5, %c0_6], %6 {strides = array<i32>} : memref<2x32xf32, #tpu.memory_space<vmem>>, vector<2x32xf32>,
    %c0_i32_7 = arith.constant 0 : i32
    %8 = arith.cmpi eq, %arg1, %c0_i32_7 : i32
    %9 = arith.extui %8 : i1 to i32
    %c0_i32_8 = arith.constant 0 : i32
    %10 = arith.cmpi ne, %9, %c0_i32_8 : i32
    scf.if %10 {
      %c0_9 = arith.constant 0 : index
      %c0_10 = arith.constant 0 : index
      %11 = vector.load %arg8[%c0_9, %c0_10] : memref<2x32xf32, #tpu.memory_space<vmem>>, vector<2x32xf32>
      %cst_11 = arith.constant 1.562500e-02 : f32
      %12 = vector.broadcast %cst_11 : f32 to vector<2x32xf32>
      %13 = arith.mulf %11, %12 : vector<2x32xf32>
      %c0_12 = arith.constant 0 : index
      %c0_13 = arith.constant 0 : index
      %14 = vector.load %arg3[%c0_12, %c0_13] : memref<32x32xf32, #tpu.memory_space<vmem>>, vector<32x32xf32>
      %cst_14 = arith.constant dense<0.000000e+00> : vector<2x32xf32>
      %15 = tpu.matmul %13, %14, %cst_14 {dimension_numbers = #tpu.dot_dimension_numbers<[1], [0], [0], [1], [0, 0, 1, 1], [], []>} : vector<2x32xf32>, vector<32x32xf32>, vector<2x32xf32> -> vector<2x32xf32>
      %c0_15 = arith.constant 0 : index
      %c0_16 = arith.constant 0 : index
      %16 = vector.load %arg4[%c0_15, %c0_16] : memref<1x32xf32, #tpu.memory_space<vmem>>, vector<1x32xf32>
      %17 = vector.broadcast %16 : vector<1x32xf32> to vector<2x32xf32>
      %18 = arith.addf %15, %17 : vector<2x32xf32>
      %19 = math.tanh %18 : vector<2x32xf32>
      %c0_17 = arith.constant 0 : index
      %c0_18 = arith.constant 0 : index
      %20 = vector.load %arg5[%c0_17, %c0_18] : memref<32x4xf32, #tpu.memory_space<vmem>>, vector<32x4xf32>
      %cst_19 = arith.constant dense<0.000000e+00> : vector<2x4xf32>
      %21 = tpu.matmul %19, %20, %cst_19 {dimension_numbers = #tpu.dot_dimension_numbers<[1], [0], [0], [1], [0, 0, 1, 1], [], []>} : vector<2x32xf32>, vector<32x4xf32>, vector<2x4xf32> -> vector<2x4xf32>
      %c0_20 = arith.constant 0 : index
      %c0_21 = arith.constant 0 : index
      %22 = vector.load %arg6[%c0_20, %c0_21] : memref<1x4xf32, #tpu.memory_space<vmem>>, vector<1x4xf32>
      %23 = vector.broadcast %22 : vector<1x4xf32> to vector<2x4xf32>
      %24 = arith.addf %21, %23 : vector<2x4xf32>
      %c0_22 = arith.constant 0 : index
      %c0_23 = arith.constant 0 : index
      %25 = vector.load %arg7[%c0_22, %c0_23] : memref<2x4xf32, #tpu.memory_space<vmem>>, vector<2x4xf32>
      tpu.vector_store %arg7[%c0_22, %c0_23], %24 {strides = array<i32>} : memref<2x4xf32, #tpu.memory_space<vmem>>, vector<2x4xf32>,
    } else {
    }
    return
  }
  func.func @transform_0(%arg0: i32, %arg1: i32) -> (i32, i32, i32) {
    %c0_i32 = arith.constant 0 : i32
    %c0_i32_0 = arith.constant 0 : i32
    return %arg0, %arg1, %c0_i32 : i32, i32, i32
  }
  func.func @transform_1(%arg0: i32, %arg1: i32) -> (i32, i32) {
    %c0_i32 = arith.constant 0 : i32
    %c0_i32_0 = arith.constant 0 : i32
    %c0_i32_1 = arith.constant 0 : i32
    return %c0_i32, %c0_i32_0 : i32, i32
  }
  func.func @transform_2(%arg0: i32, %arg1: i32) -> (i32, i32) {
    %c0_i32 = arith.constant 0 : i32
    %c0_i32_0 = arith.constant 0 : i32
    %c0_i32_1 = arith.constant 0 : i32
    return %c0_i32, %c0_i32_0 : i32, i32
  }
  func.func @transform_3(%arg0: i32, %arg1: i32) -> (i32, i32) {
    %c0_i32 = arith.constant 0 : i32
    %c0_i32_0 = arith.constant 0 : i32
    %c0_i32_1 = arith.constant 0 : i32
    return %c0_i32, %c0_i32_0 : i32, i32
  }
  func.func @transform_4(%arg0: i32, %arg1: i32) -> (i32, i32) {
    %c0_i32 = arith.constant 0 : i32
    %c0_i32_0 = arith.constant 0 : i32
    %c0_i32_1 = arith.constant 0 : i32
    return %c0_i32, %c0_i32_0 : i32, i32
  }
  func.func @transform_5(%arg0: i32, %arg1: i32) -> (i32, i32) {
    %c0_i32 = arith.constant 0 : i32
    %c0_i32_0 = arith.constant 0 : i32
    return %arg0, %c0_i32 : i32, i32
  }
}

</mosaic_0001>

<llo_original>
// kernel: tpu_custom_call.1
$region0: #{tpu_custom_call.1}
  #allocation0 [shape = 'u32[]', space=smem, size = 0x4, offset = 0x4, fixed_abs, tag = 'smem constant byte address 0x4 - core index']
  #allocation1 [shape = 'u32[144,128]{1,0:T(1,128)}', space=vmem, size = 0x12000, scoped, tag = 'internal scratch']
  #allocation2 [shape = 'f32[2,32]{1,0:T(2,128)}', space=vmem, size = 0x400, scoped, tag = 'scratch operand']
  %s0 = inlined_call_operand.vmem [shape: f32[2,64,32], index: 0, kind: input, shape index: {}]
  %s1 = inlined_call_operand.vmem [shape: f32[32,32], index: 1, kind: input, shape index: {}]
  %s2 = inlined_call_operand.vmem [shape: f32[1,32], index: 2, kind: input, shape index: {}]
  %s3 = inlined_call_operand.vmem [shape: f32[32,4], index: 3, kind: input, shape index: {}]
  %s4 = inlined_call_operand.vmem [shape: f32[1,4], index: 4, kind: input, shape index: {}]
  %s5 = inlined_call_operand.hbm [shape: f32[2,4], index: 5, kind: output, shape index: {}]
  %s6 = sld [smem:[#allocation0]]
  $region38: #{tpu_custom_call.1} parent=0
    _
  %s8 = ssub.s32 1, %s6
  %s9 = scalar_select 0, %s8, %s6
  $region1: #{tpu_custom_call.1} parent=0
    #allocation3 [shape = 'u8[1024]{0}', space=vmem, size = 0x400, scoped, tag = 'output window, operand 0, single buffered']
    #allocation4 [shape = 's32[1]{0}', space=sflag, size = 0x4, scoped, tag = 'scoped memory for tpu_custom_call.1']
    %10 = vsyncpa [#allocation4], 0
    // Predicated region
    $region2: #{tpu_custom_call.1} parent=1 // pred_check
      _
    $region3: #{tpu_custom_call.1} parent=1 // pred_check_branch
      %12 = sbr.rel (0) target = $region5
    $region4: #{tpu_custom_call.1} parent=1 // pred_region
      _
    $region5: #{tpu_custom_call.1} parent=1 // pred_fallthru
      _
    // Predicated region
    $region6: #{tpu_custom_call.1} parent=1 // pred_check
      _
    $region7: #{tpu_custom_call.1} parent=1 // pred_check_branch
      %14 = sbr.rel (0) target = $region9
    $region8: #{tpu_custom_call.1} parent=1 // pred_region
      _
    $region9: #{tpu_custom_call.1} parent=1 // pred_fallthru
      _
    // Predicated region
    $region10: #{tpu_custom_call.1} parent=1 // pred_check
      _
    $region11: #{tpu_custom_call.1} parent=1 // pred_check_branch
      %16 = sbr.rel (0) target = $region13
    $region12: #{tpu_custom_call.1} parent=1 // pred_region
      _
    $region13: #{tpu_custom_call.1} parent=1 // pred_fallthru
      _
    // Predicated region
    $region14: #{tpu_custom_call.1} parent=1 // pred_check
      _
    $region15: #{tpu_custom_call.1} parent=1 // pred_check_branch
      %18 = sbr.rel (0) target = $region17
    $region16: #{tpu_custom_call.1} parent=1 // pred_region
      _
    $region17: #{tpu_custom_call.1} parent=1 // pred_fallthru
      _
    // Predicated region
    $region18: #{tpu_custom_call.1} parent=1 // pred_check
      _
    $region19: #{tpu_custom_call.1} parent=1 // pred_check_branch
      %20 = sbr.rel (0) target = $region21
    $region20: #{tpu_custom_call.1} parent=1 // pred_region
      _
    $region21: #{tpu_custom_call.1} parent=1 // pred_fallthru
      _
    %p21 = scmp.eq.s32.totalorder 0, 0
    // Predicated region
    $region22: #{tpu_custom_call.1} parent=1 // pred_check
      %p22 = pneg %p21
    $region23: #{tpu_custom_call.1} parent=1 // pred_check_branch
      %24 = sbr.rel (%p22) target = $region25
    $region24: #{tpu_custom_call.1} parent=1 // pred_region
      %vm25 = vcmask 254976
      %26 = vst.msk [vmem:[#allocation2] sm:$0x3] %vm25, 0.0
    $region25: #{tpu_custom_call.1} parent=1 // pred_fallthru
      _
    %v27 = vld [vmem:[#allocation2] sm:$0x3]
    %v28 = vld [vmem:[%s0] sm:$0xff]
    %v29 = vld [vmem:[%s0 + $0x8] sm:$0xff]
    %v30 = vld [vmem:[%s0 + $0x10] sm:$0xff]
    %v31 = vld [vmem:[%s0 + $0x18] sm:$0xff]
    %v32 = vld [vmem:[%s0 + $0x20] sm:$0xff]
    %v33 = vld [vmem:[%s0 + $0x28] sm:$0xff]
    %v34 = vld [vmem:[%s0 + $0x30] sm:$0xff]
    %v35 = vld [vmem:[%s0 + $0x38] sm:$0xff]
    %v36 = vld [vmem:[%s0 + $0x40] sm:$0xff]
    %v37 = vld [vmem:[%s0 + $0x48] sm:$0xff]
    %v38 = vld [vmem:[%s0 + $0x50] sm:$0xff]
    %v39 = vld [vmem:[%s0 + $0x58] sm:$0xff]
    %v40 = vld [vmem:[%s0 + $0x60] sm:$0xff]
    %v41 = vld [vmem:[%s0 + $0x68] sm:$0xff]
    %v42 = vld [vmem:[%s0 + $0x70] sm:$0xff]
    %v43 = vld [vmem:[%s0 + $0x78] sm:$0xff]
    %vm44 = vcmask 261120
    %v45 = vsel %vm44, %v28, 0.0
    %v46 = vsel %vm44, %v29, 0.0
    %v47 = vadd.f32 %v45, %v46
    %v48 = vsel %vm44, %v30, 0.0
    %v49 = vadd.f32 %v47, %v48
    %v50 = vsel %vm44, %v31, 0.0
    %v51 = vadd.f32 %v49, %v50
    %v52 = vsel %vm44, %v32, 0.0
    %v53 = vadd.f32 %v51, %v52
    %v54 = vsel %vm44, %v33, 0.0
    %v55 = vadd.f32 %v53, %v54
    %v56 = vsel %vm44, %v34, 0.0
    %v57 = vadd.f32 %v55, %v56
    %v58 = vsel %vm44, %v35, 0.0
    %v59 = vadd.f32 %v57, %v58
    %v60 = vrot.slane %v59, 4
    %v61 = vadd.f32 %v59, %v60
    %v62 = vrot.slane %v61, 2
    %v63 = vadd.f32 %v61, %v62
    %v64 = vrot.slane %v63, 1
    %v65 = vadd.f32 %v63, %v64
    %v66 = vsel %vm44, %v36, 0.0
    %v67 = vsel %vm44, %v37, 0.0
    %v68 = vadd.f32 %v66, %v67
    %v69 = vsel %vm44, %v38, 0.0
    %v70 = vadd.f32 %v68, %v69
    %v71 = vsel %vm44, %v39, 0.0
    %v72 = vadd.f32 %v70, %v71
    %v73 = vsel %vm44, %v40, 0.0
    %v74 = vadd.f32 %v72, %v73
    %v75 = vsel %vm44, %v41, 0.0
    %v76 = vadd.f32 %v74, %v75
    %v77 = vsel %vm44, %v42, 0.0
    %v78 = vadd.f32 %v76, %v77
    %v79 = vsel %vm44, %v43, 0.0
    %v80 = vadd.f32 %v78, %v79
    %v81 = vrot.slane %v80, 4
    %v82 = vadd.f32 %v80, %v81
    %v83 = vrot.slane %v82, 2
    %v84 = vadd.f32 %v82, %v83
    %v85 = vrot.slane %v84, 1
    %v86 = vadd.f32 %v84, %v85
    %vm89 = vcmask 1041409
    %v90 = vsel %vm89, %v86, %v65
    %v92 = vadd.f32 %v27, %v90
    %vm93 = vcmask 254976
    %94 = vst.msk [vmem:[#allocation2] sm:$0x3] %vm93, %v92
    // Predicated region
    $region26: #{tpu_custom_call.1} parent=1 // pred_check
      %p95 = pneg %p21
    $region27: #{tpu_custom_call.1} parent=1 // pred_check_branch
      %97 = sbr.rel (%p95) target = $region29
    $region28: #{tpu_custom_call.1} parent=1 // pred_region
      %v98 = vld [vmem:[#allocation2] sm:$0x3]
      %v99 = vmul.f32 %v98, 0.015625
      %v100 = vld [vmem:[%s1] sm:$0xff]
      %v101 = vld [vmem:[%s1 + $0x8] sm:$0xff]
      %v102 = vld [vmem:[%s1 + $0x10] sm:$0xff]
      %v103 = vld [vmem:[%s1 + $0x18] sm:$0xff]
      %v104 = vld [vmem:[%s2] sm:$0x1]
      %v106 = vlaneseq
      %v107 = vshrl.u32 %v106, 7
      %v108 = vsub.s32 0, %v107
      %v109 = vrot.slane %v104, %v108
      %v112 = vsel %vm44, %v99, 0
      %114 = vmatprep.subr.mxu0 0.0
      %115 = vmatpush1.msra.mxu0 0.0
      %116 = vmatprep.subr.mxu0 0.0
      %117 = vmatpush1.msra.mxu0 0.0
      %118 = vmatprep.subr.mxu0 0.0
      %119 = vmatpush1.msra.mxu0 0.0
      %120 = vmatprep.subr.mxu0 0.0
      %121 = vmatpush1.msra.mxu0 0.0
      %122 = vmatprep.subr.mxu0 0.0
      %123 = vmatpush1.msra.mxu0 0.0
      %124 = vmatprep.subr.mxu0 0.0
      %125 = vmatpush1.msra.mxu0 0.0
      %126 = vmatprep.subr.mxu0 0.0
      %127 = vmatpush1.msra.mxu0 0.0
      %128 = vmatprep.subr.mxu0 0.0
      %129 = vmatpush1.msra.mxu0 0.0
      %130 = vmatprep.subr.mxu0 0.0
      %131 = vmatpush1.msra.mxu0 0.0
      %132 = vmatprep.subr.mxu0 0.0
      %133 = vmatpush1.msra.mxu0 0.0
      %134 = vmatprep.subr.mxu0 0.0
      %135 = vmatpush1.msra.mxu0 0.0
      %136 = vmatprep.subr.mxu0 0.0
      %137 = vmatpush1.msra.mxu0 0.0
      %138 = vmatprep.subr.mxu0 0.0
      %139 = vmatpush1.msra.mxu0 %v103
      %140 = vmatprep.subr.mxu0 0.0
      %141 = vmatpush1.msra.mxu0 %v102
      %142 = vmatprep.subr.mxu0 0.0
      %143 = vmatpush1.msra.mxu0 %v101
      %144 = vmatprep.subr.mxu0 0.0
      %145 = vmatpush1.msra.mxu0 %v100
      %146 = vmatprep.subr.mxu0 0.0
      %147 = vmatpush2.msra.mxu0 0.0
      %148 = vmatprep.subr.mxu0 0.0
      %149 = vmatpush2.msra.mxu0 0.0
      %150 = vmatprep.subr.mxu0 0.0
      %151 = vmatpush2.msra.mxu0 0.0
      %152 = vmatprep.subr.mxu0 0.0
      %153 = vmatpush2.msra.mxu0 0.0
      %154 = vmatprep.subr.mxu0 0.0
      %155 = vmatpush2.msra.mxu0 0.0
      %156 = vmatprep.subr.mxu0 0.0
      %157 = vmatpush2.msra.mxu0 0.0
      %158 = vmatprep.subr.mxu0 0.0
      %159 = vmatpush2.msra.mxu0 0.0
      %160 = vmatprep.subr.mxu0 0.0
      %161 = vmatpush2.msra.mxu0 0.0
      %162 = vmatprep.subr.mxu0 0.0
      %163 = vmatpush2.msra.mxu0 0.0
      %164 = vmatprep.subr.mxu0 0.0
      %165 = vmatpush2.msra.mxu0 0.0
      %166 = vmatprep.subr.mxu0 0.0
      %167 = vmatpush2.msra.mxu0 0.0
      %168 = vmatprep.subr.mxu0 0.0
      %169 = vmatpush2.msra.mxu0 0.0
      %170 = vmatprep.subr.mxu0 0.0
      %171 = vmatpush2.msra.mxu0 0.0
      %172 = vmatprep.subr.mxu0 0.0
      %173 = vmatpush2.msra.mxu0 0.0
      %174 = vmatprep.subr.mxu0 0.0
      %175 = vmatpush2.msra.mxu0 0.0
      %176 = vmatprep.subr.mxu0 0.0
      %177 = vmatpush2.msra.mxu0 0.0
      %178 = vmatprep.mubr.f32.mxu0 0.0
      %179 = vmatmul.mubr.f32.gmra.mxu0 %v112
      %v180 = vpop.f32.mrf.mxu0
      %v181 = vadd.f32 %v109, %v180
      %v182 = vpop.f32.mrf.mxu0
      %183 = vdwg.mxu0
      %v184 = vtanh.pop %v181
      %v185 = vld [vmem:[%s3] sm:$0xff]
      %v186 = vld [vmem:[%s3 + $0x8] sm:$0xff]
      %v187 = vld [vmem:[%s3 + $0x10] sm:$0xff]
      %v188 = vld [vmem:[%s3 + $0x18] sm:$0xff]
      %v189 = vld [vmem:[%s4] sm:$0x1]
      %v191 = vlaneseq
      %v192 = vshrl.u32 %v191, 7
      %v193 = vsub.s32 0, %v192
      %v194 = vrot.slane %v189, %v193
      %v197 = vsel %vm44, %v184, 0
      %199 = vmatprep.subr.mxu0 0.0
      %200 = vmatpush1.msra.mxu0 0.0
      %201 = vmatprep.subr.mxu0 0.0
      %202 = vmatpush1.msra.mxu0 0.0
      %203 = vmatprep.subr.mxu0 0.0
      %204 = vmatpush1.msra.mxu0 0.0
      %205 = vmatprep.subr.mxu0 0.0
      %206 = vmatpush1.msra.mxu0 0.0
      %207 = vmatprep.subr.mxu0 0.0
      %208 = vmatpush1.msra.mxu0 0.0
      %209 = vmatprep.subr.mxu0 0.0
      %210 = vmatpush1.msra.mxu0 0.0
      %211 = vmatprep.subr.mxu0 0.0
      %212 = vmatpush1.msra.mxu0 0.0
      %213 = vmatprep.subr.mxu0 0.0
      %214 = vmatpush1.msra.mxu0 0.0
      %215 = vmatprep.subr.mxu0 0.0
      %216 = vmatpush1.msra.mxu0 0.0
      %217 = vmatprep.subr.mxu0 0.0
      %218 = vmatpush1.msra.mxu0 0.0
      %219 = vmatprep.subr.mxu0 0.0
      %220 = vmatpush1.msra.mxu0 0.0
      %221 = vmatprep.subr.mxu0 0.0
      %222 = vmatpush1.msra.mxu0 0.0
      %223 = vmatprep.subr.mxu0 0.0
      %224 = vmatpush1.msra.mxu0 %v188
      %225 = vmatprep.subr.mxu0 0.0
      %226 = vmatpush1.msra.mxu0 %v187
      %227 = vmatprep.subr.mxu0 0.0
      %228 = vmatpush1.msra.mxu0 %v186
      %229 = vmatprep.subr.mxu0 0.0
      %230 = vmatpush1.msra.mxu0 %v185
      %231 = vmatprep.subr.mxu0 0.0
      %232 = vmatpush2.msra.mxu0 0.0
      %233 = vmatprep.subr.mxu0 0.0
      %234 = vmatpush2.msra.mxu0 0.0
      %235 = vmatprep.subr.mxu0 0.0
      %236 = vmatpush2.msra.mxu0 0.0
      %237 = vmatprep.subr.mxu0 0.0
      %238 = vmatpush2.msra.mxu0 0.0
      %239 = vmatprep.subr.mxu0 0.0
      %240 = vmatpush2.msra.mxu0 0.0
      %241 = vmatprep.subr.mxu0 0.0
      %242 = vmatpush2.msra.mxu0 0.0
      %243 = vmatprep.subr.mxu0 0.0
      %244 = vmatpush2.msra.mxu0 0.0
      %245 = vmatprep.subr.mxu0 0.0
      %246 = vmatpush2.msra.mxu0 0.0
      %247 = vmatprep.subr.mxu0 0.0
      %248 = vmatpush2.msra.mxu0 0.0
      %249 = vmatprep.subr.mxu0 0.0
      %250 = vmatpush2.msra.mxu0 0.0
      %251 = vmatprep.subr.mxu0 0.0
      %252 = vmatpush2.msra.mxu0 0.0
      %253 = vmatprep.subr.mxu0 0.0
      %254 = vmatpush2.msra.mxu0 0.0
      %255 = vmatprep.subr.mxu0 0.0
      %256 = vmatpush2.msra.mxu0 0.0
      %257 = vmatprep.subr.mxu0 0.0
      %258 = vmatpush2.msra.mxu0 0.0
      %259 = vmatprep.subr.mxu0 0.0
      %260 = vmatpush2.msra.mxu0 0.0
      %261 = vmatprep.subr.mxu0 0.0
      %262 = vmatpush2.msra.mxu0 0.0
      %263 = vmatprep.mubr.f32.mxu0 0.0
      %264 = vmatmul.mubr.f32.gmra.mxu0 %v197
      %v265 = vpop.f32.mrf.mxu0
      %v266 = vadd.f32 %v194, %v265
      %v267 = vpop.f32.mrf.mxu0
      %268 = vdwg.mxu0
      %vm269 = vcmask 25600
      %270 = vst.msk [vmem:[#allocation3] sm:$0x3] %vm269, %v266
    $region29: #{tpu_custom_call.1} parent=1 // pred_fallthru
      _
    // Predicated region
    $region30: #{tpu_custom_call.1} parent=1 // pred_check
      _
    $region31: #{tpu_custom_call.1} parent=1 // pred_check_branch
      %272 = sbr.rel (0) target = $region33
    $region32: #{tpu_custom_call.1} parent=1 // pred_region
      %s274 = ssub.s32 32, 32
      %275 = vsyncadd [#allocation4], %s274
      %s277 = sshll.u32 [#allocation3], 4
      %s278 = int_to_ptr.vmem [resolvable:$true] %s277
      %280 = dma.vmem_to_hbm [thread:$0]  %s278, 32, %s5, [#allocation4]
    $region33: #{tpu_custom_call.1} parent=1 // pred_fallthru
      _
    // Predicated region
    $region34: #{tpu_custom_call.1} parent=1 // pred_check
      _
    $region35: #{tpu_custom_call.1} parent=1 // pred_check_branch
      %282 = sbr.rel (0) target = $region37
    $region36: #{tpu_custom_call.1} parent=1 // pred_region
      %283 = dma.done [#allocation4], 32
    $region37: #{tpu_custom_call.1} parent=1 // pred_fallthru
      _
    %284 = vsyncpa [#allocation4], 1

</llo_original>
